<compile_context>
chip_gen: v5e
topology: v5e:2x2
jax: 0.10.0
libtpu: 0.0.40
codegen_flags: <defaults>
</compile_context>

<pallas_src>
import numpy as np
import jax
import jax.numpy as jnp
from jax.experimental import pallas as pl
from jax.experimental.pallas import tpu as pltpu

EPS = 1e-5


# ------------------------- fused Pallas forward -------------------------

def kmersnet_forward(x_nhw, p):
    """Fused Pallas forward.  x_nhw: (N, H, W) float32 -> (N, H, out_channels).

    Row-slab layout: rows = (sample, padded height), lanes = width*channels.
    """
    n, h, w = x_nhw.shape
    hp = h + 2                                  # +1 zero row top/bottom per sample
    rp = n * hp
    c_out = p['wfc'].shape[1]

    # Only input-layout prep happens outside the kernel (tiny pad + reshape).
    xp = jnp.pad(x_nhw, ((0, 0), (1, 1), (0, 0))).reshape(rp, w)

    def kernel(xp_ref, wt1_ref, b1_ref, wc1_ref, bc1_ref, wt2_ref, b2_ref,
               wm_ref, bm_ref, wfc_ref, bfc_ref, out_ref):

        def shift_down(a):                      # row r <- row r-1 (zero at top)
            zero = jnp.zeros((1, a.shape[1]), a.dtype)
            return jnp.concatenate([zero, a[:-1, :]], axis=0)

        def shift_up(a):                        # row r <- row r+1 (zero at bottom)
            zero = jnp.zeros((1, a.shape[1]), a.dtype)
            return jnp.concatenate([a[1:, :], zero], axis=0)

        def conv35(a, wt_ref, b_ref):
            # 3x5 'same' conv as 3 height-shifted matmuls vs Toeplitz weights
            # (width padding is already encoded in the weights).
            acc = jnp.dot(shift_down(a), wt_ref[0], preferred_element_type=jnp.float32)
            acc = acc + jnp.dot(a, wt_ref[1], preferred_element_type=jnp.float32)
            acc = acc + jnp.dot(shift_up(a), wt_ref[2], preferred_element_type=jnp.float32)
            return acc + b_ref[...]

        relu = lambda v: jnp.maximum(v, 0.0)

        xp_v = xp_ref[...]                                          # (rp, W)
        # KMersNet.conv: Conv(1->8, 3x5, same) + BN + ReLU
        f1 = relu(conv35(xp_v, wt1_ref, b1_ref))                    # (rp, W*8)
        # ResidualBlock2D.c1 (1x1, 8->8) + BN + ReLU
        f2 = relu(jnp.dot(f1, wc1_ref[...],
                          preferred_element_type=jnp.float32) + bc1_ref[...])
        # Re-zero the per-sample padding rows so they act as H-padding for c2.
        ph = jax.lax.broadcasted_iota(jnp.int32, f2.shape, 0) % hp
        f2 = jnp.where((ph != 0) & (ph != hp - 1), f2, 0.0)
        # ResidualBlock2D.c2 (3x5, 8->16) + BN + ReLU
        f3 = relu(conv35(f2, wt2_ref, b2_ref))                      # (rp, W*16)
        # Merged c3 (1x1, 16->32) and downsample (1x1, 8->32), BN folded,
        # single bias, add, ReLU.
        wm = wm_ref[...]
        k3 = f3.shape[1]
        f4 = jnp.dot(f3, wm[:k3, :], preferred_element_type=jnp.float32)
        f4 = f4 + jnp.dot(f1, wm[k3:, :], preferred_element_type=jnp.float32)
        res = relu(f4 + bm_ref[...])                                # (rp, W*32)
        # Drop per-sample padding rows -> (N*H, W*32), then the final Linear.
        pieces = [res[i * hp + 1: i * hp + 1 + h, :] for i in range(n)]
        valid = pieces[0] if n == 1 else jnp.concatenate(pieces, axis=0)
        out_ref[...] = jnp.dot(valid, wfc_ref[...],
                               preferred_element_type=jnp.float32) + bfc_ref[...]

    args = (xp, p['wt1'], p['b1'], p['wc1'], p['bc1'], p['wt2'], p['b2'],
            p['wm'], p['bm'], p['wfc'], p['bfc'])

    def full_spec(a):
        nd = a.ndim
        return pl.BlockSpec(a.shape, lambda i, nd=nd: (0,) * nd)

    out = pl.pallas_call(
        kernel,
        grid=(1,),
        in_specs=[full_spec(a) for a in args],
        out_specs=pl.BlockSpec((n * h, c_out), lambda i: (0, 0)),
        out_shape=jax.ShapeDtypeStruct((n * h, c_out), jnp.float32),
        compiler_params=pltpu.CompilerParams(dimension_semantics=("arbitrary",)),
    )(*args)
    return out.reshape(n, h, c_out)


# ------------------------- parameter folding (host-side, one-time) -------------------------

def _fold_bn(bias, bn):
    gamma, beta, mean, var = (np.asarray(t, np.float32) for t in bn)
    scale = gamma / np.sqrt(var + EPS)
    b = np.asarray(bias, np.float32) if bias is not None else np.zeros_like(gamma)
    return scale, (b - mean) * scale + beta


def conv35_to_toeplitz(w_oihw, bias, bn, w_img, pad_w):
    """Fold BN and express a KHxKW 'same' conv (stride 1) as KH Toeplitz
    matrices acting on a row slab whose lanes are (width, channel) flattened."""
    w = np.asarray(w_oihw, np.float32)              # (Cout, Cin, KH, KW)
    cout, cin, kh, kw = w.shape
    scale, shift = _fold_bn(bias, bn)
    w = w * scale[:, None, None, None]
    wt = np.zeros((kh, w_img * cin, w_img * cout), np.float32)
    for dh in range(kh):
        for wo in range(w_img):
            for wi in range(w_img):
                dw = wi - wo + pad_w
                if 0 <= dw < kw:
                    wt[dh, wi * cin:(wi + 1) * cin,
                       wo * cout:(wo + 1) * cout] = w[:, :, dh, dw].T
    return jnp.asarray(wt), jnp.asarray(np.tile(shift, w_img)[None, :])


def conv1x1_to_blockdiag(w_oihw, bn, w_img):
    """Fold BN and express a 1x1 conv as a block-diagonal matrix on the slab."""
    w = np.asarray(w_oihw, np.float32)              # (Cout, Cin, 1, 1)
    cout, cin = w.shape[:2]
    scale, shift = _fold_bn(None, bn)
    wmat = w[:, :, 0, 0].T * scale[None, :]         # (Cin, Cout)
    bd = np.zeros((w_img * cin, w_img * cout), np.float32)
    for wv in range(w_img):
        bd[wv * cin:(wv + 1) * cin, wv * cout:(wv + 1) * cout] = wmat
    return jnp.asarray(bd), jnp.asarray(np.tile(shift, w_img)[None, :])


def _msra(key, shape):  # OIHW, c2_msra_fill: N(0, sqrt(2/fan_in)), bias = 0
    fan_in = shape[1] * shape[2] * shape[3]
    return jax.random.normal(key, shape, jnp.float32) * jnp.sqrt(2.0 / fan_in)


def _bn_init(c):        # gamma, beta, running_mean, running_var
    return (jnp.ones((c,), jnp.float32), jnp.zeros((c,), jnp.float32),
            jnp.zeros((c,), jnp.float32), jnp.ones((c,), jnp.float32))


def init_params(key, base_channel=8, out_channels=32, width=4):
    """Deterministic synthetic parameters, shapes per KMersNet.__init__."""
    ks = jax.random.split(key, 6)
    bc = base_channel
    raw = dict(
        w_conv1=_msra(ks[0], (bc, 1, 3, 5)), b_conv1=jnp.zeros((bc,), jnp.float32),
        bn_conv1=_bn_init(bc),
        w_c1=_msra(ks[1], (bc, bc, 1, 1)), bn_c1=_bn_init(bc),
        w_c2=_msra(ks[2], (bc * 2, bc, 3, 5)), bn_c2=_bn_init(bc * 2),
        w_c3=_msra(ks[3], (bc * 4, bc * 2, 1, 1)), bn_c3=_bn_init(bc * 4),
        w_ds=_msra(ks[4], (bc * 4, bc, 1, 1)), bn_ds=_bn_init(bc * 4),
        w_fc=jax.random.normal(ks[5], (out_channels, bc * 4 * width), jnp.float32)
             * (1.0 / jnp.sqrt(bc * 4 * width)),
        b_fc=jnp.zeros((out_channels,), jnp.float32),
    )

    wt1, b1 = conv35_to_toeplitz(raw['w_conv1'], raw['b_conv1'], raw['bn_conv1'], width, 2)
    wc1, bias_c1 = conv1x1_to_blockdiag(raw['w_c1'], raw['bn_c1'], width)
    wt2, b2 = conv35_to_toeplitz(raw['w_c2'], None, raw['bn_c2'], width, 2)
    wc3, bias_c3 = conv1x1_to_blockdiag(raw['w_c3'], raw['bn_c3'], width)
    wds, bias_ds = conv1x1_to_blockdiag(raw['w_ds'], raw['bn_ds'], width)

    # Merge c3 and downsample (no nonlinearity before the residual add).
    wm = jnp.concatenate([wc3, wds], axis=0)        # ((W*16 + W*8), W*32)
    bm = bias_c3 + bias_ds

    # Final Linear: torch flattens (after permute(0,2,1,3)) as index c*W + w;
    # the row-slab lane order is w*C + c, so permute the weight instead.
    c_res = bc * 4
    wfc = jnp.transpose(raw['w_fc'].reshape(out_channels, c_res, width),
                        (2, 1, 0)).reshape(width * c_res, out_channels)

    folded = dict(wt1=wt1, b1=b1, wc1=wc1, bc1=bias_c1, wt2=wt2, b2=b2,
                  wm=wm, bm=bm, wfc=wfc, bfc=raw['b_fc'].reshape(1, -1))
    return raw, folded


# ------------------------- pure-JAX reference (verification) -------------------------

def ref_forward(x_nhwc, raw):
    def conv(x, w_oihw, pad):
        wk = jnp.transpose(w_oihw, (2, 3, 1, 0))  # HWIO
        return jax.lax.conv_general_dilated(
            x, wk, (1, 1), ((pad[0], pad[0]), (pad[1], pad[1])),
            dimension_numbers=('NHWC', 'HWIO', 'NHWC'))

    def bn(x, params):
        gamma, beta, mean, var = params
        return (x - mean) / jnp.sqrt(var + EPS) * gamma + beta

    relu = lambda v: jnp.maximum(v, 0.0)
    n, h, w, _ = x_nhwc.shape
    f1 = relu(bn(conv(x_nhwc, raw['w_conv1'], (1, 2)) + raw['b_conv1'], raw['bn_conv1']))
    o = relu(bn(conv(f1, raw['w_c1'], (0, 0)), raw['bn_c1']))
    o = relu(bn(conv(o, raw['w_c2'], (1, 2)), raw['bn_c2']))
    o = bn(conv(o, raw['w_c3'], (0, 0)), raw['bn_c3'])
    idn = bn(conv(f1, raw['w_ds'], (0, 0)), raw['bn_ds'])
    o = relu(o + idn)                                            # (N, H, W, 32)
    o = jnp.transpose(o, (0, 1, 3, 2)).reshape(n, h, -1)         # (N, H, 32*W)
    return o @ raw['w_fc'].T + raw['b_fc']


# ------------------------- main -------------------------

if __name__ == "__main__":
    base_channel, out_channels = 8, 32
    N, H, W = 2, 8, 4   # W must be 4: fc in_features = base_channel*4*4 = 32*W

    key = jax.random.PRNGKey(0)
    k_x, k_p = jax.random.split(key)
    raw, folded = init_params(k_p, base_channel, out_channels, W)

    x_nchw = jax.random.normal(k_x, (N, 1, H, W), jnp.float32)   # PyTorch layout
    x_nhw = x_nchw[:, 0, :, :]                                   # (N, H, W)

    out = kmersnet_forward(x_nhw, folded)
    out = jax.block_until_ready(out)

    ref = ref_forward(jnp.transpose(x_nchw, (0, 2, 3, 1)), raw)
    assert out.shape == (N, H, out_channels), out.shape
    assert jnp.allclose(out, ref, rtol=1e-4, atol=1e-4), \
        f"max err {jnp.max(jnp.abs(out - ref))}"

    print("KERNEL_OK")
</pallas_src>

<mosaic_0001>
module attributes {stable_mosaic.version = 11 : i64} {
  func.func @kernel(%arg0: i32, %arg1: memref<20x4xf32, #tpu.memory_space<vmem>>, %arg2: memref<3x4x32xf32, #tpu.memory_space<vmem>>, %arg3: memref<1x32xf32, #tpu.memory_space<vmem>>, %arg4: memref<32x32xf32, #tpu.memory_space<vmem>>, %arg5: memref<1x32xf32, #tpu.memory_space<vmem>>, %arg6: memref<3x32x64xf32, #tpu.memory_space<vmem>>, %arg7: memref<1x64xf32, #tpu.memory_space<vmem>>, %arg8: memref<96x128xf32, #tpu.memory_space<vmem>>, %arg9: memref<1x128xf32, #tpu.memory_space<vmem>>, %arg10: memref<128x32xf32, #tpu.memory_space<vmem>>, %arg11: memref<1x32xf32, #tpu.memory_space<vmem>>, %arg12: memref<16x32xf32, #tpu.memory_space<vmem>>) attributes {dimension_semantics = [#tpu.dimension_semantics<arbitrary>], iteration_bounds = array<i64: 1>, scalar_prefetch = 0 : i64, scratch_operands = 0 : i64, tpu.core_type = #tpu.core_type<tc>, window_params = [{pipeline_mode = #tpu.pipeline_mode<synchronous>, transform_indices = @transform_0, window_bounds = array<i64: 20, 4>}, {pipeline_mode = #tpu.pipeline_mode<synchronous>, transform_indices = @transform_1, window_bounds = array<i64: 3, 4, 32>}, {pipeline_mode = #tpu.pipeline_mode<synchronous>, transform_indices = @transform_2, window_bounds = array<i64: 1, 32>}, {pipeline_mode = #tpu.pipeline_mode<synchronous>, transform_indices = @transform_3, window_bounds = array<i64: 32, 32>}, {pipeline_mode = #tpu.pipeline_mode<synchronous>, transform_indices = @transform_4, window_bounds = array<i64: 1, 32>}, {pipeline_mode = #tpu.pipeline_mode<synchronous>, transform_indices = @transform_5, window_bounds = array<i64: 3, 32, 64>}, {pipeline_mode = #tpu.pipeline_mode<synchronous>, transform_indices = @transform_6, window_bounds = array<i64: 1, 64>}, {pipeline_mode = #tpu.pipeline_mode<synchronous>, transform_indices = @transform_7, window_bounds = array<i64: 96, 128>}, {pipeline_mode = #tpu.pipeline_mode<synchronous>, transform_indices = @transform_8, window_bounds = array<i64: 1, 128>}, {pipeline_mode = #tpu.pipeline_mode<synchronous>, transform_indices = @transform_9, window_bounds = array<i64: 128, 32>}, {pipeline_mode = #tpu.pipeline_mode<synchronous>, transform_indices = @transform_10, window_bounds = array<i64: 1, 32>}, {pipeline_mode = #tpu.pipeline_mode<synchronous>, transform_indices = @transform_11, window_bounds = array<i64: 16, 32>}]} {
    %c0 = arith.constant 0 : index
    %c0_0 = arith.constant 0 : index
    %0 = vector.load %arg1[%c0, %c0_0] : memref<20x4xf32, #tpu.memory_space<vmem>>, vector<20x4xf32>
    %cst = arith.constant 0.000000e+00 : f32
    %1 = vector.broadcast %cst : f32 to vector<1x4xf32>
    %2 = vector.extract_strided_slice %0 {offsets = [0, 0], sizes = [19, 4], strides = [1, 1]} : vector<20x4xf32> to vector<19x4xf32>
    %3 = tpu.concatenate %1, %2 in 0 : vector<1x4xf32>, vector<19x4xf32> -> vector<20x4xf32>
    %c0_1 = arith.constant 0 : index
    %c0_2 = arith.constant 0 : index
    %c0_3 = arith.constant 0 : index
    %4 = vector.load %arg2[%c0_1, %c0_2, %c0_3] : memref<3x4x32xf32, #tpu.memory_space<vmem>>, vector<1x4x32xf32>
    %5 = vector.shape_cast %4 : vector<1x4x32xf32> to vector<4x32xf32>
    %cst_4 = arith.constant dense<0.000000e+00> : vector<20x32xf32>
    %6 = tpu.matmul %3, %5, %cst_4 {dimension_numbers = #tpu.dot_dimension_numbers<[1], [0], [0], [1], [0, 0, 1, 1], [], []>} : vector<20x4xf32>, vector<4x32xf32>, vector<20x32xf32> -> vector<20x32xf32>
    %c1 = arith.constant 1 : index
    %c0_5 = arith.constant 0 : index
    %c0_6 = arith.constant 0 : index
    %7 = vector.load %arg2[%c1, %c0_5, %c0_6] : memref<3x4x32xf32, #tpu.memory_space<vmem>>, vector<1x4x32xf32>
    %8 = vector.shape_cast %7 : vector<1x4x32xf32> to vector<4x32xf32>
    %cst_7 = arith.constant dense<0.000000e+00> : vector<20x32xf32>
    %9 = tpu.matmul %0, %8, %cst_7 {dimension_numbers = #tpu.dot_dimension_numbers<[1], [0], [0], [1], [0, 0, 1, 1], [], []>} : vector<20x4xf32>, vector<4x32xf32>, vector<20x32xf32> -> vector<20x32xf32>
    %10 = arith.addf %6, %9 : vector<20x32xf32>
    %cst_8 = arith.constant 0.000000e+00 : f32
    %11 = vector.broadcast %cst_8 : f32 to vector<1x4xf32>
    %12 = vector.extract_strided_slice %0 {offsets = [1, 0], sizes = [19, 4], strides = [1, 1]} : vector<20x4xf32> to vector<19x4xf32>
    %13 = tpu.concatenate %12, %11 in 0 : vector<19x4xf32>, vector<1x4xf32> -> vector<20x4xf32>
    %c2 = arith.constant 2 : index
    %c0_9 = arith.constant 0 : index
    %c0_10 = arith.constant 0 : index
    %14 = vector.load %arg2[%c2, %c0_9, %c0_10] : memref<3x4x32xf32, #tpu.memory_space<vmem>>, vector<1x4x32xf32>
    %15 = vector.shape_cast %14 : vector<1x4x32xf32> to vector<4x32xf32>
    %cst_11 = arith.constant dense<0.000000e+00> : vector<20x32xf32>
    %16 = tpu.matmul %13, %15, %cst_11 {dimension_numbers = #tpu.dot_dimension_numbers<[1], [0], [0], [1], [0, 0, 1, 1], [], []>} : vector<20x4xf32>, vector<4x32xf32>, vector<20x32xf32> -> vector<20x32xf32>
    %17 = arith.addf %10, %16 : vector<20x32xf32>
    %c0_12 = arith.constant 0 : index
    %c0_13 = arith.constant 0 : index
    %18 = vector.load %arg3[%c0_12, %c0_13] : memref<1x32xf32, #tpu.memory_space<vmem>>, vector<1x32xf32>
    %19 = vector.broadcast %18 : vector<1x32xf32> to vector<20x32xf32>
    %20 = arith.addf %17, %19 : vector<20x32xf32>
    %cst_14 = arith.constant 0.000000e+00 : f32
    %21 = vector.broadcast %cst_14 : f32 to vector<20x32xf32>
    %22 = arith.maximumf %20, %21 : vector<20x32xf32>
    %c0_15 = arith.constant 0 : index
    %c0_16 = arith.constant 0 : index
    %23 = vector.load %arg4[%c0_15, %c0_16] : memref<32x32xf32, #tpu.memory_space<vmem>>, vector<32x32xf32>
    %cst_17 = arith.constant dense<0.000000e+00> : vector<20x32xf32>
    %24 = tpu.matmul %22, %23, %cst_17 {dimension_numbers = #tpu.dot_dimension_numbers<[1], [0], [0], [1], [0, 0, 1, 1], [], []>} : vector<20x32xf32>, vector<32x32xf32>, vector<20x32xf32> -> vector<20x32xf32>
    %c0_18 = arith.constant 0 : index
    %c0_19 = arith.constant 0 : index
    %25 = vector.load %arg5[%c0_18, %c0_19] : memref<1x32xf32, #tpu.memory_space<vmem>>, vector<1x32xf32>
    %26 = vector.broadcast %25 : vector<1x32xf32> to vector<20x32xf32>
    %27 = arith.addf %24, %26 : vector<20x32xf32>
    %cst_20 = arith.constant 0.000000e+00 : f32
    %28 = vector.broadcast %cst_20 : f32 to vector<20x32xf32>
    %29 = arith.maximumf %27, %28 : vector<20x32xf32>
    %30 = tpu.iota {dimensions = array<i32: 0>} : vector<20x32xi32>
    %c10_i32 = arith.constant 10 : i32
    %c0_i32 = arith.constant 0 : i32
    %31 = arith.cmpi eq, %c10_i32, %c0_i32 : i32
    %c1_i32 = arith.constant 1 : i32
    %32 = arith.select %31, %c1_i32, %c10_i32 : i32
    %33 = vector.broadcast %32 : i32 to vector<20x32xi32>
    %34 = arith.remsi %30, %33 : vector<20x32xi32>
    %c0_i32_21 = arith.constant 0 : i32
    %35 = vector.broadcast %c0_i32_21 : i32 to vector<20x32xi32>
    %36 = arith.cmpi ne, %34, %35 : vector<20x32xi32>
    %c0_i32_22 = arith.constant 0 : i32
    %37 = vector.broadcast %c0_i32_22 : i32 to vector<20x32xi32>
    %38 = arith.cmpi slt, %34, %37 : vector<20x32xi32>
    %c0_i32_23 = arith.constant 0 : i32
    %39 = arith.cmpi slt, %32, %c0_i32_23 : i32
    %40 = vector.broadcast %39 : i1 to vector<20x32xi1>
    %41 = vector.broadcast %40 : vector<20x32xi1> to vector<20x32xi1>
    %42 = arith.xori %38, %41 : vector<20x32xi1>
    %43 = arith.andi %42, %36 : vector<20x32xi1>
    %44 = vector.broadcast %32 : i32 to vector<20x32xi32>
    %45 = arith.addi %34, %44 : vector<20x32xi32>
    %46 = arith.select %43, %45, %34 : vector<20x32xi1>, vector<20x32xi32>
    %c0_i32_24 = arith.constant 0 : i32
    %47 = vector.broadcast %c0_i32_24 : i32 to vector<20x32xi32>
    %48 = arith.cmpi ne, %46, %47 : vector<20x32xi32>
    %c9_i32 = arith.constant 9 : i32
    %49 = vector.broadcast %c9_i32 : i32 to vector<20x32xi32>
    %50 = arith.cmpi ne, %46, %49 : vector<20x32xi32>
    %51 = arith.andi %48, %50 : vector<20x32xi1>
    %cst_25 = arith.constant 0.000000e+00 : f32
    %52 = vector.broadcast %cst_25 : f32 to vector<20x32xf32>
    %53 = arith.select %51, %29, %52 : vector<20x32xi1>, vector<20x32xf32>
    %cst_26 = arith.constant 0.000000e+00 : f32
    %54 = vector.broadcast %cst_26 : f32 to vector<1x32xf32>
    %55 = vector.extract_strided_slice %53 {offsets = [0, 0], sizes = [19, 32], strides = [1, 1]} : vector<20x32xf32> to vector<19x32xf32>
    %56 = tpu.concatenate %54, %55 in 0 : vector<1x32xf32>, vector<19x32xf32> -> vector<20x32xf32>
    %c0_27 = arith.constant 0 : index
    %c0_28 = arith.constant 0 : index
    %c0_29 = arith.constant 0 : index
    %57 = vector.load %arg6[%c0_27, %c0_28, %c0_29] : memref<3x32x64xf32, #tpu.memory_space<vmem>>, vector<1x32x64xf32>
    %58 = vector.shape_cast %57 : vector<1x32x64xf32> to vector<32x64xf32>
    %cst_30 = arith.constant dense<0.000000e+00> : vector<20x64xf32>
    %59 = tpu.matmul %56, %58, %cst_30 {dimension_numbers = #tpu.dot_dimension_numbers<[1], [0], [0], [1], [0, 0, 1, 1], [], []>} : vector<20x32xf32>, vector<32x64xf32>, vector<20x64xf32> -> vector<20x64xf32>
    %c1_31 = arith.constant 1 : index
    %c0_32 = arith.constant 0 : index
    %c0_33 = arith.constant 0 : index
    %60 = vector.load %arg6[%c1_31, %c0_32, %c0_33] : memref<3x32x64xf32, #tpu.memory_space<vmem>>, vector<1x32x64xf32>
    %61 = vector.shape_cast %60 : vector<1x32x64xf32> to vector<32x64xf32>
    %cst_34 = arith.constant dense<0.000000e+00> : vector<20x64xf32>
    %62 = tpu.matmul %53, %61, %cst_34 {dimension_numbers = #tpu.dot_dimension_numbers<[1], [0], [0], [1], [0, 0, 1, 1], [], []>} : vector<20x32xf32>, vector<32x64xf32>, vector<20x64xf32> -> vector<20x64xf32>
    %63 = arith.addf %59, %62 : vector<20x64xf32>
    %cst_35 = arith.constant 0.000000e+00 : f32
    %64 = vector.broadcast %cst_35 : f32 to vector<1x32xf32>
    %65 = vector.extract_strided_slice %53 {offsets = [1, 0], sizes = [19, 32], strides = [1, 1]} : vector<20x32xf32> to vector<19x32xf32>
    %66 = tpu.concatenate %65, %64 in 0 : vector<19x32xf32>, vector<1x32xf32> -> vector<20x32xf32>
    %c2_36 = arith.constant 2 : index
    %c0_37 = arith.constant 0 : index
    %c0_38 = arith.constant 0 : index
    %67 = vector.load %arg6[%c2_36, %c0_37, %c0_38] : memref<3x32x64xf32, #tpu.memory_space<vmem>>, vector<1x32x64xf32>
    %68 = vector.shape_cast %67 : vector<1x32x64xf32> to vector<32x64xf32>
    %cst_39 = arith.constant dense<0.000000e+00> : vector<20x64xf32>
    %69 = tpu.matmul %66, %68, %cst_39 {dimension_numbers = #tpu.dot_dimension_numbers<[1], [0], [0], [1], [0, 0, 1, 1], [], []>} : vector<20x32xf32>, vector<32x64xf32>, vector<20x64xf32> -> vector<20x64xf32>
    %70 = arith.addf %63, %69 : vector<20x64xf32>
    %c0_40 = arith.constant 0 : index
    %c0_41 = arith.constant 0 : index
    %71 = vector.load %arg7[%c0_40, %c0_41] : memref<1x64xf32, #tpu.memory_space<vmem>>, vector<1x64xf32>
    %72 = vector.broadcast %71 : vector<1x64xf32> to vector<20x64xf32>
    %73 = arith.addf %70, %72 : vector<20x64xf32>
    %cst_42 = arith.constant 0.000000e+00 : f32
    %74 = vector.broadcast %cst_42 : f32 to vector<20x64xf32>
    %75 = arith.maximumf %73, %74 : vector<20x64xf32>
    %c0_43 = arith.constant 0 : index
    %c0_44 = arith.constant 0 : index
    %76 = vector.load %arg8[%c0_43, %c0_44] : memref<96x128xf32, #tpu.memory_space<vmem>>, vector<96x128xf32>
    %77 = vector.extract_strided_slice %76 {offsets = [0, 0], sizes = [64, 128], strides = [1, 1]} : vector<96x128xf32> to vector<64x128xf32>
    %cst_45 = arith.constant dense<0.000000e+00> : vector<20x128xf32>
    %78 = tpu.matmul %75, %77, %cst_45 {dimension_numbers = #tpu.dot_dimension_numbers<[1], [0], [0], [1], [0, 0, 1, 1], [], []>} : vector<20x64xf32>, vector<64x128xf32>, vector<20x128xf32> -> vector<20x128xf32>
    %79 = vector.extract_strided_slice %76 {offsets = [64, 0], sizes = [32, 128], strides = [1, 1]} : vector<96x128xf32> to vector<32x128xf32>
    %cst_46 = arith.constant dense<0.000000e+00> : vector<20x128xf32>
    %80 = tpu.matmul %22, %79, %cst_46 {dimension_numbers = #tpu.dot_dimension_numbers<[1], [0], [0], [1], [0, 0, 1, 1], [], []>} : vector<20x32xf32>, vector<32x128xf32>, vector<20x128xf32> -> vector<20x128xf32>
    %81 = arith.addf %78, %80 : vector<20x128xf32>
    %c0_47 = arith.constant 0 : index
    %c0_48 = arith.constant 0 : index
    %82 = vector.load %arg9[%c0_47, %c0_48] : memref<1x128xf32, #tpu.memory_space<vmem>>, vector<1x128xf32>
    %83 = vector.broadcast %82 : vector<1x128xf32> to vector<20x128xf32>
    %84 = arith.addf %81, %83 : vector<20x128xf32>
    %cst_49 = arith.constant 0.000000e+00 : f32
    %85 = vector.broadcast %cst_49 : f32 to vector<20x128xf32>
    %86 = arith.maximumf %84, %85 : vector<20x128xf32>
    %87 = vector.extract_strided_slice %86 {offsets = [1, 0], sizes = [8, 128], strides = [1, 1]} : vector<20x128xf32> to vector<8x128xf32>
    %88 = vector.extract_strided_slice %86 {offsets = [11, 0], sizes = [8, 128], strides = [1, 1]} : vector<20x128xf32> to vector<8x128xf32>
    %89 = tpu.concatenate %87, %88 in 0 : vector<8x128xf32>, vector<8x128xf32> -> vector<16x128xf32>
    %c0_50 = arith.constant 0 : index
    %c0_51 = arith.constant 0 : index
    %90 = vector.load %arg10[%c0_50, %c0_51] : memref<128x32xf32, #tpu.memory_space<vmem>>, vector<128x32xf32>
    %cst_52 = arith.constant dense<0.000000e+00> : vector<16x32xf32>
    %91 = tpu.matmul %89, %90, %cst_52 {dimension_numbers = #tpu.dot_dimension_numbers<[1], [0], [0], [1], [0, 0, 1, 1], [], []>} : vector<16x128xf32>, vector<128x32xf32>, vector<16x32xf32> -> vector<16x32xf32>
    %c0_53 = arith.constant 0 : index
    %c0_54 = arith.constant 0 : index
    %92 = vector.load %arg11[%c0_53, %c0_54] : memref<1x32xf32, #tpu.memory_space<vmem>>, vector<1x32xf32>
    %93 = vector.broadcast %92 : vector<1x32xf32> to vector<16x32xf32>
    %94 = arith.addf %91, %93 : vector<16x32xf32>
    %c0_55 = arith.constant 0 : index
    %c0_56 = arith.constant 0 : index
    %95 = vector.load %arg12[%c0_55, %c0_56] : memref<16x32xf32, #tpu.memory_space<vmem>>, vector<16x32xf32>
    tpu.vector_store %arg12[%c0_55, %c0_56], %94 {strides = array<i32>} : memref<16x32xf32, #tpu.memory_space<vmem>>, vector<16x32xf32>,
    return
  }
  func.func @transform_0(%arg0: i32) -> (i32, i32) {
    %c0_i32 = arith.constant 0 : i32
    %c0_i32_0 = arith.constant 0 : i32
    %c0_i32_1 = arith.constant 0 : i32
    return %c0_i32, %c0_i32_0 : i32, i32
  }
  func.func @transform_1(%arg0: i32) -> (i32, i32, i32) {
    %c0_i32 = arith.constant 0 : i32
    %c0_i32_0 = arith.constant 0 : i32
    %c0_i32_1 = arith.constant 0 : i32
    %c0_i32_2 = arith.constant 0 : i32
    return %c0_i32, %c0_i32_0, %c0_i32_1 : i32, i32, i32
  }
  func.func @transform_2(%arg0: i32) -> (i32, i32) {
    %c0_i32 = arith.constant 0 : i32
    %c0_i32_0 = arith.constant 0 : i32
    %c0_i32_1 = arith.constant 0 : i32
    return %c0_i32, %c0_i32_0 : i32, i32
  }
  func.func @transform_3(%arg0: i32) -> (i32, i32) {
    %c0_i32 = arith.constant 0 : i32
    %c0_i32_0 = arith.constant 0 : i32
    %c0_i32_1 = arith.constant 0 : i32
    return %c0_i32, %c0_i32_0 : i32, i32
  }
  func.func @transform_4(%arg0: i32) -> (i32, i32) {
    %c0_i32 = arith.constant 0 : i32
    %c0_i32_0 = arith.constant 0 : i32
    %c0_i32_1 = arith.constant 0 : i32
    return %c0_i32, %c0_i32_0 : i32, i32
  }
  func.func @transform_5(%arg0: i32) -> (i32, i32, i32) {
    %c0_i32 = arith.constant 0 : i32
    %c0_i32_0 = arith.constant 0 : i32
    %c0_i32_1 = arith.constant 0 : i32
    %c0_i32_2 = arith.constant 0 : i32
    return %c0_i32, %c0_i32_0, %c0_i32_1 : i32, i32, i32
  }
  func.func @transform_6(%arg0: i32) -> (i32, i32) {
    %c0_i32 = arith.constant 0 : i32
    %c0_i32_0 = arith.constant 0 : i32
    %c0_i32_1 = arith.constant 0 : i32
    return %c0_i32, %c0_i32_0 : i32, i32
  }
  func.func @transform_7(%arg0: i32) -> (i32, i32) {
    %c0_i32 = arith.constant 0 : i32
    %c0_i32_0 = arith.constant 0 : i32
    %c0_i32_1 = arith.constant 0 : i32
    return %c0_i32, %c0_i32_0 : i32, i32
  }
  func.func @transform_8(%arg0: i32) -> (i32, i32) {
    %c0_i32 = arith.constant 0 : i32
    %c0_i32_0 = arith.constant 0 : i32
    %c0_i32_1 = arith.constant 0 : i32
    return %c0_i32, %c0_i32_0 : i32, i32
  }
  func.func @transform_9(%arg0: i32) -> (i32, i32) {
    %c0_i32 = arith.constant 0 : i32
    %c0_i32_0 = arith.constant 0 : i32
    %c0_i32_1 = arith.constant 0 : i32
    return %c0_i32, %c0_i32_0 : i32, i32
  }
  func.func @transform_10(%arg0: i32) -> (i32, i32) {
    %c0_i32 = arith.constant 0 : i32
    %c0_i32_0 = arith.constant 0 : i32
    %c0_i32_1 = arith.constant 0 : i32
    return %c0_i32, %c0_i32_0 : i32, i32
  }
  func.func @transform_11(%arg0: i32) -> (i32, i32) {
    %c0_i32 = arith.constant 0 : i32
    %c0_i32_0 = arith.constant 0 : i32
    %c0_i32_1 = arith.constant 0 : i32
    return %c0_i32, %c0_i32_0 : i32, i32
  }
}

</mosaic_0001>

<llo_original>
// kernel: tpu_custom_call.1
$region0: #{tpu_custom_call.1}
  #allocation0 [shape = 'u32[]', space=smem, size = 0x4, offset = 0x4, fixed_abs, tag = 'smem constant byte address 0x4 - core index']
  #allocation1 [shape = 'u32[72,128]{1,0:T(1,128)}', space=vmem, size = 0x9000, scoped, tag = 'internal scratch']
  %s0 = inlined_call_operand.vmem [shape: f32[20,4], index: 0, kind: input, shape index: {}]
  %s1 = inlined_call_operand.vmem [shape: f32[3,4,32], index: 1, kind: input, shape index: {}]
  %s2 = inlined_call_operand.vmem [shape: f32[1,32], index: 2, kind: input, shape index: {}]
  %s3 = inlined_call_operand.vmem [shape: f32[32,32], index: 3, kind: input, shape index: {}]
  %s4 = inlined_call_operand.vmem [shape: f32[1,32], index: 4, kind: input, shape index: {}]
  %s5 = inlined_call_operand.vmem [shape: f32[3,32,64], index: 5, kind: input, shape index: {}]
  %s6 = inlined_call_operand.vmem [shape: f32[1,64], index: 6, kind: input, shape index: {}]
  %s7 = inlined_call_operand.hbm [shape: f32[96,128], index: 7, kind: input, shape index: {}]
  %s8 = inlined_call_operand.vmem [shape: f32[1,128], index: 8, kind: input, shape index: {}]
  %s9 = inlined_call_operand.vmem [shape: f32[128,32], index: 9, kind: input, shape index: {}]
  %s10 = inlined_call_operand.vmem [shape: f32[1,32], index: 10, kind: input, shape index: {}]
  %s11 = inlined_call_operand.hbm [shape: f32[16,32], index: 11, kind: output, shape index: {}]
  %s12 = sld [smem:[#allocation0]]
  $region58: #{tpu_custom_call.1} parent=0
    _
  %s14 = ssub.s32 1, %s12
  %s15 = scalar_select 0, %s14, %s12
  $region1: #{tpu_custom_call.1} parent=0
    #allocation2 [shape = 'u8[49152]{0}', space=vmem, size = 0xc000, scoped, tag = 'input window, operand 7, single buffered']
    #allocation3 [shape = 's32[1]{0}', space=sflag, size = 0x4, scoped, tag = 'scoped memory for tpu_custom_call.1']
    #allocation4 [shape = 's32[1]{0}', space=sflag, size = 0x4, scoped, tag = 'scoped memory for tpu_custom_call.1']
    #allocation5 [shape = 'u8[8192]{0}', space=vmem, size = 0x2000, scoped, tag = 'output window, operand 0, single buffered']
    %16 = vsyncpa [#allocation3], 0
    %17 = vsyncpa [#allocation4], 0
    // Predicated region
    $region2: #{tpu_custom_call.1} parent=1 // pred_check
      _
    $region3: #{tpu_custom_call.1} parent=1 // pred_check_branch
      %19 = sbr.rel (0) target = $region5
    $region4: #{tpu_custom_call.1} parent=1 // pred_region
      _
    $region5: #{tpu_custom_call.1} parent=1 // pred_fallthru
      _
    // Predicated region
    $region6: #{tpu_custom_call.1} parent=1 // pred_check
      _
    $region7: #{tpu_custom_call.1} parent=1 // pred_check_branch
      %21 = sbr.rel (0) target = $region9
    $region8: #{tpu_custom_call.1} parent=1 // pred_region
      _
    $region9: #{tpu_custom_call.1} parent=1 // pred_fallthru
      _
    // Predicated region
    $region10: #{tpu_custom_call.1} parent=1 // pred_check
      _
    $region11: #{tpu_custom_call.1} parent=1 // pred_check_branch
      %23 = sbr.rel (0) target = $region13
    $region12: #{tpu_custom_call.1} parent=1 // pred_region
      _
    $region13: #{tpu_custom_call.1} parent=1 // pred_fallthru
      _
    // Predicated region
    $region14: #{tpu_custom_call.1} parent=1 // pred_check
      _
    $region15: #{tpu_custom_call.1} parent=1 // pred_check_branch
      %25 = sbr.rel (0) target = $region17
    $region16: #{tpu_custom_call.1} parent=1 // pred_region
      _
    $region17: #{tpu_custom_call.1} parent=1 // pred_fallthru
      _
    // Predicated region
    $region18: #{tpu_custom_call.1} parent=1 // pred_check
      _
    $region19: #{tpu_custom_call.1} parent=1 // pred_check_branch
      %27 = sbr.rel (0) target = $region21
    $region20: #{tpu_custom_call.1} parent=1 // pred_region
      _
    $region21: #{tpu_custom_call.1} parent=1 // pred_fallthru
      _
    // Predicated region
    $region22: #{tpu_custom_call.1} parent=1 // pred_check
      _
    $region23: #{tpu_custom_call.1} parent=1 // pred_check_branch
      %29 = sbr.rel (0) target = $region25
    $region24: #{tpu_custom_call.1} parent=1 // pred_region
      _
    $region25: #{tpu_custom_call.1} parent=1 // pred_fallthru
      _
    // Predicated region
    $region26: #{tpu_custom_call.1} parent=1 // pred_check
      _
    $region27: #{tpu_custom_call.1} parent=1 // pred_check_branch
      %31 = sbr.rel (0) target = $region29
    $region28: #{tpu_custom_call.1} parent=1 // pred_region
      _
    $region29: #{tpu_custom_call.1} parent=1 // pred_fallthru
      _
    // Predicated region
    $region30: #{tpu_custom_call.1} parent=1 // pred_check
      _
    $region31: #{tpu_custom_call.1} parent=1 // pred_check_branch
      %33 = sbr.rel (0) target = $region33
    $region32: #{tpu_custom_call.1} parent=1 // pred_region
      %35 = vsyncadd [#allocation3], 0
      %s36 = sshll.u32 %s7, 4
      %s37 = int_to_ptr.hbm [resolvable:$true] %s36
      %s38 = sshll.u32 [#allocation2], 4
      %s39 = int_to_ptr.vmem [resolvable:$true] %s38
      %44 = dma.hbm_to_vmem [thread:$0]  %s37, 1536, %s39, [#allocation3], 128, 128, 8
    $region33: #{tpu_custom_call.1} parent=1 // pred_fallthru
      _
    // Predicated region
    $region34: #{tpu_custom_call.1} parent=1 // pred_check
      _
    $region35: #{tpu_custom_call.1} parent=1 // pred_check_branch
      %46 = sbr.rel (0) target = $region37
    $region36: #{tpu_custom_call.1} parent=1 // pred_region
      _
    $region37: #{tpu_custom_call.1} parent=1 // pred_fallthru
      _
    // Predicated region
    $region38: #{tpu_custom_call.1} parent=1 // pred_check
      _
    $region39: #{tpu_custom_call.1} parent=1 // pred_check_branch
      %48 = sbr.rel (0) target = $region41
    $region40: #{tpu_custom_call.1} parent=1 // pred_region
      _
    $region41: #{tpu_custom_call.1} parent=1 // pred_fallthru
      _
    // Predicated region
    $region42: #{tpu_custom_call.1} parent=1 // pred_check
      _
    $region43: #{tpu_custom_call.1} parent=1 // pred_check_branch
      %50 = sbr.rel (0) target = $region45
    $region44: #{tpu_custom_call.1} parent=1 // pred_region
      _
    $region45: #{tpu_custom_call.1} parent=1 // pred_fallthru
      _
    // Predicated region
    $region46: #{tpu_custom_call.1} parent=1 // pred_check
      _
    $region47: #{tpu_custom_call.1} parent=1 // pred_check_branch
      %52 = sbr.rel (0) target = $region49
    $region48: #{tpu_custom_call.1} parent=1 // pred_region
      %54 = dma.done [#allocation3], 1536
    $region49: #{tpu_custom_call.1} parent=1 // pred_fallthru
      _
    %v55 = vld [vmem:[%s0] sm:$0xff]
    %v56 = vld [vmem:[%s0 + $0x8] sm:$0xff]
    %v57 = vld [vmem:[%s0 + $0x10] sm:$0xf]
    %vm61 = vcmask 1040384
    %v62 = vrot.slane %v55, 7
    %v63 = vrot.slane %v56, 7
    %v64 = vsel %vm61, %v62, %v63
    %v65 = vrot.slane %v57, 7
    %v66 = vsel %vm61, %v63, %v65
    %v68 = vsel %vm61, 0.0, %v62
    %v69 = vld [vmem:[%s1] sm:$0xf]
    %s70 = scalar_lea.vmem %s1, 4
    %v71 = vld [vmem:[%s70] sm:$0xf]
    %vm72 = vcmask 31744
    %v73 = vsel %vm72, %v55, 0
    %v75 = vsel %vm72, %v56, 0
    %v77 = vsel %vm72, %v57, 0
    %vm79 = vcmask 1043456
    %v81 = vsel %vm79, %v71, 0
    %83 = vmatpush.msra.mxu0 0.0
    %84 = vmatpush.msra.mxu0 0.0
    %85 = vmatpush.msra.mxu0 0.0
    %86 = vmatpush.msra.mxu0 0.0
    %87 = vmatpush.msra.mxu0 0.0
    %88 = vmatpush.msra.mxu0 0.0
    %89 = vmatpush.msra.mxu0 0.0
    %90 = vmatpush.msra.mxu0 0.0
    %91 = vmatpush.msra.mxu0 0.0
    %92 = vmatpush.msra.mxu0 0.0
    %93 = vmatpush.msra.mxu0 0.0
    %94 = vmatpush.msra.mxu0 0.0
    %95 = vmatpush.msra.mxu0 0.0
    %96 = vmatpush.msra.mxu0 0.0
    %97 = vmatpush.msra.mxu0 0.0
    %98 = vmatpush.msra.mxu0 %v81
    %99 = vmatmul.f32.gmra.mxu0 %v73
    %v100 = vpop.f32.mrf.mxu0
    %v101 = vadd.f32 0.0, %v100
    %102 = vmatmul.f32.gmra.mxu0 %v75
    %v103 = vpop.f32.mrf.mxu0
    %v104 = vadd.f32 0.0, %v103
    %105 = vmatmul.f32.gmra.mxu0 %v77
    %v106 = vpop.f32.mrf.mxu0
    %v107 = vadd.f32 0.0, %v106
    %108 = vdwg.mxu0
    %v110 = vsel %vm72, %v68, 0
    %v112 = vsel %vm72, %v64, 0
    %v114 = vsel %vm72, %v66, 0
    %v117 = vsel %vm79, %v69, 0
    %119 = vmatpush.msra.mxu0 0.0
    %120 = vmatpush.msra.mxu0 0.0
    %121 = vmatpush.msra.mxu0 0.0
    %122 = vmatpush.msra.mxu0 0.0
    %123 = vmatpush.msra.mxu0 0.0
    %124 = vmatpush.msra.mxu0 0.0
    %125 = vmatpush.msra.mxu0 0.0
    %126 = vmatpush.msra.mxu0 0.0
    %127 = vmatpush.msra.mxu0 0.0
    %128 = vmatpush.msra.mxu0 0.0
    %129 = vmatpush.msra.mxu0 0.0
    %130 = vmatpush.msra.mxu0 0.0
    %131 = vmatpush.msra.mxu0 0.0
    %132 = vmatpush.msra.mxu0 0.0
    %133 = vmatpush.msra.mxu0 0.0
    %134 = vmatpush.msra.mxu0 %v117
    %135 = vmatmul.f32.gmra.mxu0 %v110
    %v136 = vpop.f32.mrf.mxu0
    %v137 = vadd.f32 %v101, %v136
    %138 = vmatmul.f32.gmra.mxu0 %v112
    %v139 = vpop.f32.mrf.mxu0
    %v140 = vadd.f32 %v104, %v139
    %141 = vmatmul.f32.gmra.mxu0 %v114
    %v142 = vpop.f32.mrf.mxu0
    %v143 = vadd.f32 %v107, %v142
    %144 = vdwg.mxu0
    %vm145 = vcmask 1046528
    %v146 = vrot.slane %v55, 1
    %v147 = vrot.slane %v56, 1
    %v148 = vsel %vm145, %v146, %v147
    %v149 = vrot.slane %v57, 1
    %v150 = vsel %vm145, %v147, %v149
    %vm152 = vcmask 1042432
    %v153 = vsel %vm152, %v149, 0.0
    %s154 = scalar_lea.vmem %s1, 8
    %v155 = vld [vmem:[%s154] sm:$0xf]
    %v156 = vsel %vm72, %v148, 0
    %v158 = vsel %vm72, %v150, 0
    %v161 = vsel %vm72, %v153, 0
    %v164 = vsel %vm79, %v155, 0
    %166 = vmatpush.msra.mxu0 0.0
    %167 = vmatpush.msra.mxu0 0.0
    %168 = vmatpush.msra.mxu0 0.0
    %169 = vmatpush.msra.mxu0 0.0
    %170 = vmatpush.msra.mxu0 0.0
    %171 = vmatpush.msra.mxu0 0.0
    %172 = vmatpush.msra.mxu0 0.0
    %173 = vmatpush.msra.mxu0 0.0
    %174 = vmatpush.msra.mxu0 0.0
    %175 = vmatpush.msra.mxu0 0.0
    %176 = vmatpush.msra.mxu0 0.0
    %177 = vmatpush.msra.mxu0 0.0
    %178 = vmatpush.msra.mxu0 0.0
    %179 = vmatpush.msra.mxu0 0.0
    %180 = vmatpush.msra.mxu0 0.0
    %181 = vmatpush.msra.mxu0 %v164
    %182 = vmatmul.f32.gmra.mxu0 %v156
    %v183 = vpop.f32.mrf.mxu0
    %v184 = vadd.f32 0.0, %v183
    %185 = vmatmul.f32.gmra.mxu0 %v158
    %v186 = vpop.f32.mrf.mxu0
    %v187 = vadd.f32 0.0, %v186
    %188 = vmatmul.f32.gmra.mxu0 %v161
    %v189 = vpop.f32.mrf.mxu0
    %v190 = vadd.f32 0.0, %v189
    %191 = vdwg.mxu0
    %v192 = vadd.f32 %v137, %v184
    %v193 = vadd.f32 %v140, %v187
    %v194 = vadd.f32 %v143, %v190
    %v195 = vld [vmem:[%s2] sm:$0x1]
    %v197 = vperm.slane %v195, 0
    %v199 = vadd.f32 %v192, %v197
    %v200 = vadd.f32 %v193, %v197
    %v201 = vadd.f32 %v194, %v197
    %v202 = vmax.f32 %v199, 0.0
    %v203 = vmax.f32 %v200, 0.0
    %v204 = vmax.f32 %v201, 0.0
    %v205 = vld [vmem:[%s3] sm:$0xff]
    %v206 = vld [vmem:[%s3 + $0x8] sm:$0xff]
    %v207 = vld [vmem:[%s3 + $0x10] sm:$0xff]
    %v208 = vld [vmem:[%s3 + $0x18] sm:$0xff]
    %v209 = vld [vmem:[%s4] sm:$0x1]
    %v211 = vperm.slane %v209, 0
    %vm213 = vcmask 261120
    %v215 = vsel %vm213, %v202, 0
    %v218 = vsel %vm213, %v203, 0
    %v221 = vsel %vm213, %v204, 0
    %223 = vmatpush.msra.mxu0 0.0
    %224 = vmatpush.msra.mxu0 0.0
    %225 = vmatpush.msra.mxu0 0.0
    %226 = vmatpush.msra.mxu0 0.0
    %227 = vmatpush.msra.mxu0 0.0
    %228 = vmatpush.msra.mxu0 0.0
    %229 = vmatpush.msra.mxu0 0.0
    %230 = vmatpush.msra.mxu0 0.0
    %231 = vmatpush.msra.mxu0 0.0
    %232 = vmatpush.msra.mxu0 0.0
    %233 = vmatpush.msra.mxu0 0.0
    %234 = vmatpush.msra.mxu0 0.0
    %235 = vmatpush.msra.mxu0 %v208
    %236 = vmatpush.msra.mxu0 %v207
    %237 = vmatpush.msra.mxu0 %v206
    %238 = vmatpush.msra.mxu0 %v205
    %239 = vmatmul.f32.gmra.mxu0 %v215
    %v240 = vpop.f32.mrf.mxu0
    %v241 = vadd.f32 %v211, %v240
    %242 = vmatmul.f32.gmra.mxu0 %v218
    %v243 = vpop.f32.mrf.mxu0
    %v244 = vadd.f32 %v211, %v243
    %245 = vmatmul.f32.gmra.mxu0 %v221
    %v246 = vpop.f32.mrf.mxu0
    %v247 = vadd.f32 %v211, %v246
    %248 = vdwg.mxu0
    %v249 = vmax.f32 %v241, 0.0
    %v250 = vmax.f32 %v244, 0.0
    %v251 = vmax.f32 %v247, 0.0
    %v252 = vlaneseq
    %v253 = vshrl.u32 %v252, 7
    %v254 = vadd.s32 %v253, 8
    %v255 = vadd.s32 %v253, 16
    %vm256 = vcmp.lt.s32.totalorder %v253, 0
    %v257 = vsub.s32 0, %v253
    %v258 = vsel %vm256, %v257, %v253
    %v259 = vand.u32 %v258, 65535
    %v260 = vshrl.u32 %v258, 16
    %v262 = vmul.u32 %v259, 52429
    %v263 = vmul.u32 %v259, 52428
    %v264 = vmul.u32 %v260, 52429
    %v265 = vmul.u32 %v260, 52428
    %v266 = vshll.u32 %v263, 16
    %v267 = vshrl.u32 %v263, 16
    %v268 = vshll.u32 %v264, 16
    %v269 = vshrl.u32 %v264, 16
    %vm270 = vc.u32 %v262, %v266
    %v271 = vsel %vm270, 1, 0
    %v272 = vadd.s32 %v262, %v266
    %v273 = vadd.s32 %v265, %v271
    %vm274 = vc.u32 %v272, %v268
    %v275 = vsel %vm274, 1, 0
    %v276 = vadd.s32 %v272, %v268
    %v277 = vadd.s32 %v273, %v275
    %v278 = vadd.s32 %v277, %v267
    %v279 = vadd.s32 %v278, %v269
    %v280 = vshrl.u32 %v279, 3
    %v281 = vmul.u32 %v280, 10
    %v282 = vsub.s32 %v258, %v281
    %v283 = vsub.s32 0, %v282
    %v284 = vsel %vm256, %v283, %v282
    %vm285 = vcmp.lt.s32.totalorder %v254, 0
    %v286 = vsub.s32 0, %v254
    %v287 = vsel %vm285, %v286, %v254
    %v288 = vand.u32 %v287, 65535
    %v289 = vshrl.u32 %v287, 16
    %v291 = vmul.u32 %v288, 52429
    %v292 = vmul.u32 %v288, 52428
    %v293 = vmul.u32 %v289, 52429
    %v294 = vmul.u32 %v289, 52428
    %v295 = vshll.u32 %v292, 16
    %v296 = vshrl.u32 %v292, 16
    %v297 = vshll.u32 %v293, 16
    %v298 = vshrl.u32 %v293, 16
    %vm299 = vc.u32 %v291, %v295
    %v300 = vsel %vm299, 1, 0
    %v301 = vadd.s32 %v291, %v295
    %v302 = vadd.s32 %v294, %v300
    %vm303 = vc.u32 %v301, %v297
    %v304 = vsel %vm303, 1, 0
    %v305 = vadd.s32 %v301, %v297
    %v306 = vadd.s32 %v302, %v304
    %v307 = vadd.s32 %v306, %v296
    %v308 = vadd.s32 %v307, %v298
    %v309 = vshrl.u32 %v308, 3
    %v310 = vmul.u32 %v309, 10
    %v311 = vsub.s32 %v287, %v310
    %v312 = vsub.s32 0, %v311
    %v313 = vsel %vm285, %v312, %v311
    %vm314 = vcmp.lt.s32.totalorder %v255, 0
    %v315 = vsub.s32 0, %v255
    %v316 = vsel %vm314, %v315, %v255
    %v317 = vand.u32 %v316, 65535
    %v318 = vshrl.u32 %v316, 16
    %v320 = vmul.u32 %v317, 52429
    %v321 = vmul.u32 %v317, 52428
    %v322 = vmul.u32 %v318, 52429
    %v323 = vmul.u32 %v318, 52428
    %v324 = vshll.u32 %v321, 16
    %v325 = vshrl.u32 %v321, 16
    %v326 = vshll.u32 %v322, 16
    %v327 = vshrl.u32 %v322, 16
    %vm328 = vc.u32 %v320, %v324
    %v329 = vsel %vm328, 1, 0
    %v330 = vadd.s32 %v320, %v324
    %v331 = vadd.s32 %v323, %v329
    %vm332 = vc.u32 %v330, %v326
    %v333 = vsel %vm332, 1, 0
    %v334 = vadd.s32 %v330, %v326
    %v335 = vadd.s32 %v331, %v333
    %v336 = vadd.s32 %v335, %v325
    %v337 = vadd.s32 %v336, %v327
    %v338 = vshrl.u32 %v337, 3
    %v339 = vmul.u32 %v338, 10
    %v340 = vsub.s32 %v316, %v339
    %v341 = vsub.s32 0, %v340
    %v342 = vsel %vm314, %v341, %v340
    %vm343 = vcmp.ne.s32.totalorder %v284, 0
    %vm344 = vcmp.ne.s32.totalorder %v313, 0
    %vm345 = vcmp.ne.s32.totalorder %v342, 0
    %vm346 = vcmp.lt.s32.totalorder %v284, 0
    %vm347 = vcmp.lt.s32.totalorder %v313, 0
    %vm348 = vcmp.lt.s32.totalorder %v342, 0
    %vm349 = vmand %vm346, %vm343
    %vm350 = vmand %vm347, %vm344
    %vm351 = vmand %vm348, %vm345
    %v352 = vadd.s32 %v284, 10
    %v353 = vadd.s32 %v313, 10
    %v354 = vadd.s32 %v342, 10
    %v355 = vsel %vm349, %v352, %v284
    %v356 = vsel %vm350, %v353, %v313
    %v357 = vsel %vm351, %v354, %v342
    %vm358 = vcmp.ne.s32.totalorder %v355, 0
    %vm359 = vcmp.ne.s32.totalorder %v356, 0
    %vm360 = vcmp.ne.s32.totalorder %v357, 0
    %vm361 = vcmp.ne.s32.totalorder %v355, 9
    %vm362 = vcmp.ne.s32.totalorder %v356, 9
    %vm363 = vcmp.ne.s32.totalorder %v357, 9
    %vm364 = vmand %vm358, %vm361
    %vm365 = vmand %vm359, %vm362
    %vm366 = vmand %vm360, %vm363
    %v367 = vsel %vm364, %v249, 0.0
    %v368 = vsel %vm365, %v250, 0.0
    %v369 = vsel %vm366, %v251, 0.0
    %v373 = vrot.slane %v367, 7
    %v374 = vrot.slane %v368, 7
    %v375 = vsel %vm61, %v373, %v374
    %v376 = vrot.slane %v369, 7
    %v377 = vsel %vm61, %v374, %v376
    %v379 = vsel %vm61, 0.0, %v373
    %v380 = vld [vmem:[%s5] sm:$0xff]
    %v381 = vld [vmem:[%s5 + $0x8] sm:$0xff]
    %v382 = vld [vmem:[%s5 + $0x10] sm:$0xff]
    %v383 = vld [vmem:[%s5 + $0x18] sm:$0xff]
    %s384 = scalar_lea.vmem %s5, 32
    %v385 = vld [vmem:[%s384] sm:$0xff]
    %v386 = vld [vmem:[%s384 + $0x8] sm:$0xff]
    %v387 = vld [vmem:[%s384 + $0x10] sm:$0xff]
    %v388 = vld [vmem:[%s384 + $0x18] sm:$0xff]
    %v389 = vsel %vm213, %v367, 0
    %v391 = vsel %vm213, %v368, 0
    %v393 = vsel %vm213, %v369, 0
    %395 = vmatpush.msra.mxu0 0.0
    %396 = vmatpush.msra.mxu0 0.0
    %397 = vmatpush.msra.mxu0 0.0
    %398 = vmatpush.msra.mxu0 0.0
    %399 = vmatpush.msra.mxu0 0.0
    %400 = vmatpush.msra.mxu0 0.0
    %401 = vmatpush.msra.mxu0 0.0
    %402 = vmatpush.msra.mxu0 0.0
    %403 = vmatpush.msra.mxu0 0.0
    %404 = vmatpush.msra.mxu0 0.0
    %405 = vmatpush.msra.mxu0 0.0
    %406 = vmatpush.msra.mxu0 0.0
    %407 = vmatpush.msra.mxu0 %v388
    %408 = vmatpush.msra.mxu0 %v387
    %409 = vmatpush.msra.mxu0 %v386
    %410 = vmatpush.msra.mxu0 %v385
    %411 = vmatmul.f32.gmra.mxu0 %v389
    %v412 = vpop.f32.mrf.mxu0
    %v413 = vadd.f32 0.0, %v412
    %414 = vmatmul.f32.gmra.mxu0 %v391
    %v415 = vpop.f32.mrf.mxu0
    %v416 = vadd.f32 0.0, %v415
    %417 = vmatmul.f32.gmra.mxu0 %v393
    %v418 = vpop.f32.mrf.mxu0
    %v419 = vadd.f32 0.0, %v418
    %420 = vdwg.mxu0
    %v422 = vsel %vm213, %v379, 0
    %v424 = vsel %vm213, %v375, 0
    %v426 = vsel %vm213, %v377, 0
    %428 = vmatpush.msra.mxu0 0.0
    %429 = vmatpush.msra.mxu0 0.0
    %430 = vmatpush.msra.mxu0 0.0
    %431 = vmatpush.msra.mxu0 0.0
    %432 = vmatpush.msra.mxu0 0.0
    %433 = vmatpush.msra.mxu0 0.0
    %434 = vmatpush.msra.mxu0 0.0
    %435 = vmatpush.msra.mxu0 0.0
    %436 = vmatpush.msra.mxu0 0.0
    %437 = vmatpush.msra.mxu0 0.0
    %438 = vmatpush.msra.mxu0 0.0
    %439 = vmatpush.msra.mxu0 0.0
    %440 = vmatpush.msra.mxu0 %v383
    %441 = vmatpush.msra.mxu0 %v382
    %442 = vmatpush.msra.mxu0 %v381
    %443 = vmatpush.msra.mxu0 %v380
    %444 = vmatmul.f32.gmra.mxu0 %v422
    %v445 = vpop.f32.mrf.mxu0
    %v446 = vadd.f32 %v413, %v445
    %447 = vmatmul.f32.gmra.mxu0 %v424
    %v448 = vpop.f32.mrf.mxu0
    %v449 = vadd.f32 %v416, %v448
    %450 = vmatmul.f32.gmra.mxu0 %v426
    %v451 = vpop.f32.mrf.mxu0
    %v452 = vadd.f32 %v419, %v451
    %453 = vdwg.mxu0
    %v454 = vrot.slane %v367, 1
    %v455 = vrot.slane %v368, 1
    %v456 = vsel %vm145, %v454, %v455
    %v457 = vrot.slane %v369, 1
    %v458 = vsel %vm145, %v455, %v457
    %v460 = vsel %vm152, %v457, 0.0
    %s461 = scalar_lea.vmem %s5, 64
    %v462 = vld [vmem:[%s461] sm:$0xff]
    %v463 = vld [vmem:[%s461 + $0x8] sm:$0xff]
    %v464 = vld [vmem:[%s461 + $0x10] sm:$0xff]
    %v465 = vld [vmem:[%s461 + $0x18] sm:$0xff]
    %v466 = vsel %vm213, %v456, 0
    %v468 = vsel %vm213, %v458, 0
    %v471 = vsel %vm213, %v460, 0
    %473 = vmatpush.msra.mxu0 0.0
    %474 = vmatpush.msra.mxu0 0.0
    %475 = vmatpush.msra.mxu0 0.0
    %476 = vmatpush.msra.mxu0 0.0
    %477 = vmatpush.msra.mxu0 0.0
    %478 = vmatpush.msra.mxu0 0.0
    %479 = vmatpush.msra.mxu0 0.0
    %480 = vmatpush.msra.mxu0 0.0
    %481 = vmatpush.msra.mxu0 0.0
    %482 = vmatpush.msra.mxu0 0.0
    %483 = vmatpush.msra.mxu0 0.0
    %484 = vmatpush.msra.mxu0 0.0
    %485 = vmatpush.msra.mxu0 %v465
    %486 = vmatpush.msra.mxu0 %v464
    %487 = vmatpush.msra.mxu0 %v463
    %488 = vmatpush.msra.mxu0 %v462
    %489 = vmatmul.f32.gmra.mxu0 %v466
    %v490 = vpop.f32.mrf.mxu0
    %v491 = vadd.f32 0.0, %v490
    %492 = vmatmul.f32.gmra.mxu0 %v468
    %v493 = vpop.f32.mrf.mxu0
    %v494 = vadd.f32 0.0, %v493
    %495 = vmatmul.f32.gmra.mxu0 %v471
    %v496 = vpop.f32.mrf.mxu0
    %v497 = vadd.f32 0.0, %v496
    %498 = vdwg.mxu0
    %v499 = vadd.f32 %v446, %v491
    %v500 = vadd.f32 %v449, %v494
    %v501 = vadd.f32 %v452, %v497
    %v502 = vld [vmem:[%s6] sm:$0x1]
    %v504 = vperm.slane %v502, 0
    %v506 = vadd.f32 %v499, %v504
    %v507 = vadd.f32 %v500, %v504
    %v508 = vadd.f32 %v501, %v504
    %v509 = vmax.f32 %v506, 0.0
    %v510 = vmax.f32 %v507, 0.0
    %v511 = vmax.f32 %v508, 0.0
    %v512 = vld [vmem:[#allocation2] sm:$0xff]
    %v513 = vld [vmem:[#allocation2 + $0x8] sm:$0xff]
    %v514 = vld [vmem:[#allocation2 + $0x10] sm:$0xff]
    %v515 = vld [vmem:[#allocation2 + $0x18] sm:$0xff]
    %v516 = vld [vmem:[#allocation2 + $0x20] sm:$0xff]
    %v517 = vld [vmem:[#allocation2 + $0x28] sm:$0xff]
    %v518 = vld [vmem:[#allocation2 + $0x30] sm:$0xff]
    %v519 = vld [vmem:[#allocation2 + $0x38] sm:$0xff]
    %v520 = vld [vmem:[#allocation2 + $0x40] sm:$0xff]
    %v521 = vld [vmem:[#allocation2 + $0x48] sm:$0xff]
    %v522 = vld [vmem:[#allocation2 + $0x50] sm:$0xff]
    %v523 = vld [vmem:[#allocation2 + $0x58] sm:$0xff]
    %524 = vmatpush.msra.mxu0 0.0
    %525 = vmatpush.msra.mxu0 0.0
    %526 = vmatpush.msra.mxu0 0.0
    %527 = vmatpush.msra.mxu0 0.0
    %528 = vmatpush.msra.mxu0 0.0
    %529 = vmatpush.msra.mxu0 0.0
    %530 = vmatpush.msra.mxu0 0.0
    %531 = vmatpush.msra.mxu0 0.0
    %532 = vmatpush.msra.mxu0 0.0
    %533 = vmatpush.msra.mxu0 0.0
    %534 = vmatpush.msra.mxu0 0.0
    %535 = vmatpush.msra.mxu0 0.0
    %536 = vmatpush.msra.mxu0 %v523
    %537 = vmatpush.msra.mxu0 %v522
    %538 = vmatpush.msra.mxu0 %v521
    %539 = vmatpush.msra.mxu0 %v520
    %540 = vmatmul.f32.gmra.mxu0 %v215
    %v541 = vpop.f32.mrf.mxu0
    %v542 = vadd.f32 0.0, %v541
    %543 = vmatmul.f32.gmra.mxu0 %v218
    %v544 = vpop.f32.mrf.mxu0
    %v545 = vadd.f32 0.0, %v544
    %546 = vmatmul.f32.gmra.mxu0 %v221
    %v547 = vpop.f32.mrf.mxu0
    %v548 = vadd.f32 0.0, %v547
    %549 = vdwg.mxu0
    %vm550 = vcmask 523264
    %v552 = vsel %vm550, %v509, 0
    %v555 = vsel %vm550, %v510, 0
    %v558 = vsel %vm550, %v511, 0
    %560 = vmatpush.msra.mxu0 0.0
    %561 = vmatpush.msra.mxu0 0.0
    %562 = vmatpush.msra.mxu0 0.0
    %563 = vmatpush.msra.mxu0 0.0
    %564 = vmatpush.msra.mxu0 0.0
    %565 = vmatpush.msra.mxu0 0.0
    %566 = vmatpush.msra.mxu0 0.0
    %567 = vmatpush.msra.mxu0 0.0
    %568 = vmatpush.msra.mxu0 %v519
    %569 = vmatpush.msra.mxu0 %v518
    %570 = vmatpush.msra.mxu0 %v517
    %571 = vmatpush.msra.mxu0 %v516
    %572 = vmatpush.msra.mxu0 %v515
    %573 = vmatpush.msra.mxu0 %v514
    %574 = vmatpush.msra.mxu0 %v513
    %575 = vmatpush.msra.mxu0 %v512
    %576 = vmatmul.f32.gmra.mxu0 %v552
    %v577 = vpop.f32.mrf.mxu0
    %v578 = vadd.f32 %v542, %v577
    %579 = vmatmul.f32.gmra.mxu0 %v555
    %v580 = vpop.f32.mrf.mxu0
    %v581 = vadd.f32 %v545, %v580
    %582 = vmatmul.f32.gmra.mxu0 %v558
    %v583 = vpop.f32.mrf.mxu0
    %v584 = vadd.f32 %v548, %v583
    %585 = vdwg.mxu0
    %v586 = vld [vmem:[%s8] sm:$0x1]
    %v588 = vperm.slane %v586, 0
    %v590 = vadd.f32 %v578, %v588
    %v591 = vadd.f32 %v581, %v588
    %v592 = vadd.f32 %v584, %v588
    %v593 = vmax.f32 %v590, 0.0
    %v594 = vmax.f32 %v591, 0.0
    %v595 = vmax.f32 %v592, 0.0
    %v598 = vrot.slane %v593, 1
    %v599 = vrot.slane %v594, 1
    %v600 = vsel %vm145, %v598, %v599
    %vm603 = vcmask 1044480
    %v604 = vrot.slane %v594, 3
    %v605 = vrot.slane %v595, 3
    %v606 = vsel %vm603, %v604, %v605
    %v608 = vld [vmem:[%s9] sm:$0xff]
    %v609 = vld [vmem:[%s9 + $0x8] sm:$0xff]
    %v610 = vld [vmem:[%s9 + $0x10] sm:$0xff]
    %v611 = vld [vmem:[%s9 + $0x18] sm:$0xff]
    %v612 = vld [vmem:[%s9 + $0x20] sm:$0xff]
    %v613 = vld [vmem:[%s9 + $0x28] sm:$0xff]
    %v614 = vld [vmem:[%s9 + $0x30] sm:$0xff]
    %v615 = vld [vmem:[%s9 + $0x38] sm:$0xff]
    %v616 = vld [vmem:[%s9 + $0x40] sm:$0xff]
    %v617 = vld [vmem:[%s9 + $0x48] sm:$0xff]
    %v618 = vld [vmem:[%s9 + $0x50] sm:$0xff]
    %v619 = vld [vmem:[%s9 + $0x58] sm:$0xff]
    %v620 = vld [vmem:[%s9 + $0x60] sm:$0xff]
    %v621 = vld [vmem:[%s9 + $0x68] sm:$0xff]
    %v622 = vld [vmem:[%s9 + $0x70] sm:$0xff]
    %v623 = vld [vmem:[%s9 + $0x78] sm:$0xff]
    %v624 = vld [vmem:[%s10] sm:$0x1]
    %v626 = vperm.slane %v624, 0
    %628 = vmatpush.msra.mxu0 %v623
    %629 = vmatpush.msra.mxu0 %v622
    %630 = vmatpush.msra.mxu0 %v621
    %631 = vmatpush.msra.mxu0 %v620
    %632 = vmatpush.msra.mxu0 %v619
    %633 = vmatpush.msra.mxu0 %v618
    %634 = vmatpush.msra.mxu0 %v617
    %635 = vmatpush.msra.mxu0 %v616
    %636 = vmatpush.msra.mxu0 %v615
    %637 = vmatpush.msra.mxu0 %v614
    %638 = vmatpush.msra.mxu0 %v613
    %639 = vmatpush.msra.mxu0 %v612
    %640 = vmatpush.msra.mxu0 %v611
    %641 = vmatpush.msra.mxu0 %v610
    %642 = vmatpush.msra.mxu0 %v609
    %643 = vmatpush.msra.mxu0 %v608
    %644 = vmatmul.f32.gmra.mxu0 %v600
    %v645 = vpop.f32.mrf.mxu0
    %v646 = vadd.f32 %v626, %v645
    %647 = vmatmul.f32.gmra.mxu0 %v606
    %v648 = vpop.f32.mrf.mxu0
    %v649 = vadd.f32 %v626, %v648
    %650 = vdwg.mxu0
    %651 = vst.msk [vmem:[#allocation5] sm:$0xff] %vm213, %v646
    %652 = vst.msk [vmem:[#allocation5 + $0x8] sm:$0xff] %vm213, %v649
    // Predicated region
    $region50: #{tpu_custom_call.1} parent=1 // pred_check
      _
    $region51: #{tpu_custom_call.1} parent=1 // pred_check_branch
      %654 = sbr.rel (0) target = $region53
    $region52: #{tpu_custom_call.1} parent=1 // pred_region
      %656 = vsyncadd [#allocation4], 0
      %s657 = sshll.u32 [#allocation5], 4
      %s658 = int_to_ptr.vmem [resolvable:$true] %s657
      %s659 = sshll.u32 %s11, 4
      %s660 = int_to_ptr.hbm [resolvable:$true] %s659
      %665 = dma.vmem_to_hbm [thread:$0]  %s658, 256, %s660, [#allocation4], 128, 128, 8
    $region53: #{tpu_custom_call.1} parent=1 // pred_fallthru
      _
    // Predicated region
    $region54: #{tpu_custom_call.1} parent=1 // pred_check
      _
    $region55: #{tpu_custom_call.1} parent=1 // pred_check_branch
      %667 = sbr.rel (0) target = $region57
    $region56: #{tpu_custom_call.1} parent=1 // pred_region
      %669 = dma.done [#allocation4], 256
    $region57: #{tpu_custom_call.1} parent=1 // pred_fallthru
      _
    %670 = vsyncpa [#allocation3], 1
    %671 = vsyncpa [#allocation4], 1

</llo_original>
